<compile_context>
chip_gen: v7x
topology: tpu7x:2x2x1
jax: 0.10.0
libtpu: 0.0.40
codegen_flags: <defaults>
</compile_context>

<pallas_src>
import jax
import jax.numpy as jnp
from jax.experimental import pallas as pl
from jax.experimental.pallas import tpu as pltpu


def _round_up(n, m):
    return ((n + m - 1) // m) * m


def _linear_bias_relu_kernel(x_ref, wt_ref, b_ref, o_ref):
    # x_ref:  (bm, 128)   VMEM, batch tile
    # wt_ref: (128, 128)  VMEM, pre-transposed weight (in_features, out_features)
    # b_ref:  (1, 128)    VMEM, bias with `other` already folded in
    # o_ref:  (bm, 128)   VMEM
    y = jnp.dot(x_ref[...], wt_ref[...], preferred_element_type=jnp.float32)
    o_ref[...] = jnp.maximum(y + b_ref[...], 0.0).astype(o_ref.dtype)


def model_forward(x, weight, bias, other, *, bm=None):
    """Equivalent of: relu(Linear(128,128)(x) + other).

    x:      (B, 128)   float32
    weight: (128, 128) float32, PyTorch layout (out_features, in_features)
    bias:   (128,)     float32
    other:  python float / 0-d scalar
    """
    B, D_in = x.shape
    D_out = weight.shape[0]

    # One-time 64 KiB host transpose -> canonical (M,K)x(K,N) inside the kernel.
    wt = jnp.transpose(weight).astype(jnp.float32)          # (in, out)
    # Fold the scalar addend into the bias on the host (free; removes an operand).
    b2 = (bias.astype(jnp.float32) + jnp.float32(other)).reshape(1, D_out)

    # Batch tile: multiple of 8 (f32 sublane group).  Default heuristic:
    #  - large (<=4096 rows) to amortize per-step pipeline overhead,
    #  - but no larger than ceil(B/2) so the grid has >=2 steps whenever
    #    possible and the "parallel" axis can use both TCs (v7x megacore).
    if bm is None:
        bm = max(8, min(4096, _round_up(pl.cdiv(B, 2), 8)))
    bm = max(8, _round_up(bm, 8))

    grid = (pl.cdiv(B, bm),)   # ragged last block handled by Pallas (rows independent)

    # Double-buffered x + out tiles plus resident weight/bias.
    tile_bytes = 2 * 2 * bm * max(D_in, D_out) * 4 + 2 * D_in * D_out * 4
    compiler_kwargs = dict(dimension_semantics=("parallel",))
    if tile_bytes > 12 * 1024 * 1024:
        # Only needed if a caller pushes bm well past 4096 (v5e's 16 MiB default
        # scoped-VMEM limit would otherwise reject the larger tiles).
        compiler_kwargs["vmem_limit_bytes"] = min(2 * tile_bytes, 56 * 1024 * 1024)

    out = pl.pallas_call(
        _linear_bias_relu_kernel,
        out_shape=jax.ShapeDtypeStruct((B, D_out), jnp.float32),
        grid_spec=pl.GridSpec(
            grid=grid,
            in_specs=[
                pl.BlockSpec((bm, D_in), lambda i: (i, 0)),      # x tile per step
                pl.BlockSpec((D_in, D_out), lambda i: (0, 0)),   # weight^T: VMEM-resident
                pl.BlockSpec((1, D_out), lambda i: (0, 0)),      # bias+other: VMEM-resident
            ],
            out_specs=pl.BlockSpec((bm, D_out), lambda i: (i, 0)),
        ),
        compiler_params=pltpu.CompilerParams(**compiler_kwargs),
    )(x, wt, b2)

    return out


def reference_forward(x, weight, bias, other):
    return jnp.maximum(x @ weight.T + bias + other, 0.0)


if __name__ == "__main__":
    key = jax.random.PRNGKey(0)
    k_x1, k_x2, k_x3, k_w, k_b = jax.random.split(key, 5)

    D = 128
    # Deterministic parameter init (mimics nn.Linear uniform(-1/sqrt(fan_in), 1/sqrt(fan_in)))
    bound = 1.0 / jnp.sqrt(jnp.float32(D))
    weight = jax.random.uniform(k_w, (D, D), minval=-bound, maxval=bound,
                                dtype=jnp.float32)
    bias = jax.random.uniform(k_b, (D,), minval=-bound, maxval=bound,
                              dtype=jnp.float32)
    other = 0.5  # `self.other` addend

    # Case 1: the module's own shape (B=1) — single partial block, no host pad.
    x1 = jax.random.normal(k_x1, (1, D), dtype=jnp.float32)
    out1 = jax.block_until_ready(model_forward(x1, weight, bias, other))
    ref1 = reference_forward(x1, weight, bias, other)
    assert out1.shape == (1, D)
    assert jnp.allclose(out1, ref1, atol=1e-5, rtol=1e-5), "mismatch vs reference (B=1)"

    # Case 2: batched, divisible shape — exercises the tiled/pipelined path (grid=2).
    B2 = 256
    x2 = jax.random.normal(k_x2, (B2, D), dtype=jnp.float32)
    out2 = jax.block_until_ready(model_forward(x2, weight, bias, other, bm=128))
    ref2 = reference_forward(x2, weight, bias, other)
    assert out2.shape == (B2, D)
    assert jnp.allclose(out2, ref2, atol=1e-5, rtol=1e-5), "mismatch vs reference (B=256)"

    # Case 3: ragged batch — last block is partial, no pad/slice round trips.
    B3 = 300
    x3 = jax.random.normal(k_x3, (B3, D), dtype=jnp.float32)
    out3 = jax.block_until_ready(model_forward(x3, weight, bias, other))
    ref3 = reference_forward(x3, weight, bias, other)
    assert out3.shape == (B3, D)
    assert jnp.allclose(out3, ref3, atol=1e-5, rtol=1e-5), "mismatch vs reference (B=300, ragged)"

    print("KERNEL_OK")
</pallas_src>

<mosaic_0001>
module attributes {stable_mosaic.version = 11 : i64} {
  func.func @_linear_bias_relu_kernel(%arg0: i32, %arg1: memref<8x128xf32, #tpu.memory_space<vmem>>, %arg2: memref<128x128xf32, #tpu.memory_space<vmem>>, %arg3: memref<1x128xf32, #tpu.memory_space<vmem>>, %arg4: memref<8x128xf32, #tpu.memory_space<vmem>>) attributes {dimension_semantics = [#tpu.dimension_semantics<parallel>], iteration_bounds = array<i64: 1>, scalar_prefetch = 0 : i64, scratch_operands = 0 : i64, tpu.core_type = #tpu.core_type<tc>, window_params = [{transform_indices = @transform_0, window_bounds = array<i64: 8, 128>}, {pipeline_mode = #tpu.pipeline_mode<synchronous>, transform_indices = @transform_1, window_bounds = array<i64: 128, 128>}, {pipeline_mode = #tpu.pipeline_mode<synchronous>, transform_indices = @transform_2, window_bounds = array<i64: 1, 128>}, {transform_indices = @transform_3, window_bounds = array<i64: 8, 128>}]} {
    %c0 = arith.constant 0 : index
    %c0_0 = arith.constant 0 : index
    %0 = vector.load %arg1[%c0, %c0_0] : memref<8x128xf32, #tpu.memory_space<vmem>>, vector<8x128xf32>
    %c0_1 = arith.constant 0 : index
    %c0_2 = arith.constant 0 : index
    %1 = vector.load %arg2[%c0_1, %c0_2] : memref<128x128xf32, #tpu.memory_space<vmem>>, vector<128x128xf32>
    %cst = arith.constant dense<0.000000e+00> : vector<8x128xf32>
    %2 = tpu.matmul %0, %1, %cst {dimension_numbers = #tpu.dot_dimension_numbers<[1], [0], [0], [1], [0, 0, 1, 1], [], []>} : vector<8x128xf32>, vector<128x128xf32>, vector<8x128xf32> -> vector<8x128xf32>
    %c0_3 = arith.constant 0 : index
    %c0_4 = arith.constant 0 : index
    %3 = vector.load %arg3[%c0_3, %c0_4] : memref<1x128xf32, #tpu.memory_space<vmem>>, vector<1x128xf32>
    %4 = vector.broadcast %3 : vector<1x128xf32> to vector<8x128xf32>
    %5 = arith.addf %2, %4 : vector<8x128xf32>
    %cst_5 = arith.constant 0.000000e+00 : f32
    %6 = vector.broadcast %cst_5 : f32 to vector<8x128xf32>
    %7 = arith.maximumf %5, %6 : vector<8x128xf32>
    %c0_6 = arith.constant 0 : index
    %c0_7 = arith.constant 0 : index
    %8 = vector.load %arg4[%c0_6, %c0_7] : memref<8x128xf32, #tpu.memory_space<vmem>>, vector<8x128xf32>
    tpu.vector_store %arg4[%c0_6, %c0_7], %7 {strides = array<i32>} : memref<8x128xf32, #tpu.memory_space<vmem>>, vector<8x128xf32>,
    return
  }
  func.func @transform_0(%arg0: i32) -> (i32, i32) {
    %c0_i32 = arith.constant 0 : i32
    %c0_i32_0 = arith.constant 0 : i32
    return %arg0, %c0_i32 : i32, i32
  }
  func.func @transform_1(%arg0: i32) -> (i32, i32) {
    %c0_i32 = arith.constant 0 : i32
    %c0_i32_0 = arith.constant 0 : i32
    %c0_i32_1 = arith.constant 0 : i32
    return %c0_i32, %c0_i32_0 : i32, i32
  }
  func.func @transform_2(%arg0: i32) -> (i32, i32) {
    %c0_i32 = arith.constant 0 : i32
    %c0_i32_0 = arith.constant 0 : i32
    %c0_i32_1 = arith.constant 0 : i32
    return %c0_i32, %c0_i32_0 : i32, i32
  }
  func.func @transform_3(%arg0: i32) -> (i32, i32) {
    %c0_i32 = arith.constant 0 : i32
    %c0_i32_0 = arith.constant 0 : i32
    return %arg0, %c0_i32 : i32, i32
  }
}

</mosaic_0001>

<llo_original>
// kernel: tpu_custom_call.1
$region0: #{tpu_custom_call.1}
  #allocation0 [shape = 'u32[]', space=smem, size = 0x4, offset = 0x4, fixed_abs, tag = 'smem constant byte address 0x4 - core index']
  #allocation1 [shape = 'u32[144,128]{1,0:T(1,128)}', space=vmem, size = 0x12000, scoped, tag = 'internal scratch']
  %s0 = inlined_call_operand.hbm [shape: f32[1,128], index: 0, kind: input, shape index: {}]
  %s1 = inlined_call_operand.hbm [shape: f32[128,128], index: 1, kind: input, shape index: {}]
  %s2 = inlined_call_operand.vmem [shape: f32[1,128], index: 2, kind: input, shape index: {}]
  %s3 = inlined_call_operand.hbm [shape: f32[1,128], index: 3, kind: output, shape index: {}]
  %s4 = sld [smem:[#allocation0]]
  $region30: #{tpu_custom_call.1} parent=0
    _
  %s6 = ssub.s32 1, %s4
  %s7 = scalar_select 0, %s6, %s4
  $region1: #{tpu_custom_call.1} parent=0
    #allocation2 [shape = 'u8[4096]{0}', space=vmem, size = 0x1000, scoped, tag = 'input window, operand 0, single buffered']
    #allocation3 [shape = 's32[1]{0}', space=sflag, size = 0x4, scoped, tag = 'scoped memory for tpu_custom_call.1']
    #allocation4 [shape = 's32[1]{0}', space=sflag, size = 0x4, scoped, tag = 'scoped memory for tpu_custom_call.1']
    #allocation5 [shape = 'u8[65536]{0}', space=vmem, size = 0x10000, scoped, tag = 'input window, operand 1, single buffered']
    #allocation6 [shape = 's32[1]{0}', space=sflag, size = 0x4, scoped, tag = 'scoped memory for tpu_custom_call.1']
    #allocation7 [shape = 'u8[4096]{0}', space=vmem, size = 0x1000, scoped, tag = 'output window, operand 0, single buffered']
    %8 = vsyncpa [#allocation3], 0
    %9 = vsyncpa [#allocation6], 0
    %10 = vsyncpa [#allocation4], 0
    // Predicated region
    $region2: #{tpu_custom_call.1} parent=1 // pred_check
      _
    $region3: #{tpu_custom_call.1} parent=1 // pred_check_branch
      %12 = sbr.rel (0) target = $region5
    $region4: #{tpu_custom_call.1} parent=1 // pred_region
      %s14 = ssub.s32 128, 16
      %15 = vsyncadd [#allocation3], %s14
      %s16 = sshll.u32 [#allocation2], 4
      %s17 = int_to_ptr.vmem [resolvable:$true] %s16
      %22 = dma.hbm_to_vmem [thread:$0]  %s0, 16, %s17, [#allocation3], 16, 16, 1
    $region5: #{tpu_custom_call.1} parent=1 // pred_fallthru
      _
    // Predicated region
    $region6: #{tpu_custom_call.1} parent=1 // pred_check
      _
    $region7: #{tpu_custom_call.1} parent=1 // pred_check_branch
      %24 = sbr.rel (0) target = $region9
    $region8: #{tpu_custom_call.1} parent=1 // pred_region
      %s26 = ssub.s32 2048, 2048
      %27 = vsyncadd [#allocation6], %s26
      %s28 = sshll.u32 [#allocation5], 4
      %s29 = int_to_ptr.vmem [resolvable:$true] %s28
      %34 = dma.hbm_to_vmem [thread:$0]  %s1, 2048, %s29, [#allocation6], 128, 128, 8
    $region9: #{tpu_custom_call.1} parent=1 // pred_fallthru
      _
    // Predicated region
    $region10: #{tpu_custom_call.1} parent=1 // pred_check
      _
    $region11: #{tpu_custom_call.1} parent=1 // pred_check_branch
      %36 = sbr.rel (0) target = $region13
    $region12: #{tpu_custom_call.1} parent=1 // pred_region
      _
    $region13: #{tpu_custom_call.1} parent=1 // pred_fallthru
      _
    // Predicated region
    $region14: #{tpu_custom_call.1} parent=1 // pred_check
      _
    $region15: #{tpu_custom_call.1} parent=1 // pred_check_branch
      %38 = sbr.rel (0) target = $region17
    $region16: #{tpu_custom_call.1} parent=1 // pred_region
      %39 = dma.done [#allocation3], 128
    $region17: #{tpu_custom_call.1} parent=1 // pred_fallthru
      _
    // Predicated region
    $region18: #{tpu_custom_call.1} parent=1 // pred_check
      _
    $region19: #{tpu_custom_call.1} parent=1 // pred_check_branch
      %41 = sbr.rel (0) target = $region21
    $region20: #{tpu_custom_call.1} parent=1 // pred_region
      %42 = dma.done [#allocation6], 2048
    $region21: #{tpu_custom_call.1} parent=1 // pred_fallthru
      _
    %v43 = vld [vmem:[#allocation2] sm:$0xff]
    %v44 = vld [vmem:[#allocation5] sm:$0xff]
    %v45 = vld [vmem:[#allocation5 + $0x8] sm:$0xff]
    %v46 = vld [vmem:[#allocation5 + $0x10] sm:$0xff]
    %v47 = vld [vmem:[#allocation5 + $0x18] sm:$0xff]
    %v48 = vld [vmem:[#allocation5 + $0x20] sm:$0xff]
    %v49 = vld [vmem:[#allocation5 + $0x28] sm:$0xff]
    %v50 = vld [vmem:[#allocation5 + $0x30] sm:$0xff]
    %v51 = vld [vmem:[#allocation5 + $0x38] sm:$0xff]
    %v52 = vld [vmem:[#allocation5 + $0x40] sm:$0xff]
    %v53 = vld [vmem:[#allocation5 + $0x48] sm:$0xff]
    %v54 = vld [vmem:[#allocation5 + $0x50] sm:$0xff]
    %v55 = vld [vmem:[#allocation5 + $0x58] sm:$0xff]
    %v56 = vld [vmem:[#allocation5 + $0x60] sm:$0xff]
    %v57 = vld [vmem:[#allocation5 + $0x68] sm:$0xff]
    %v58 = vld [vmem:[#allocation5 + $0x70] sm:$0xff]
    %v59 = vld [vmem:[#allocation5 + $0x78] sm:$0xff]
    %v60 = vld [vmem:[%s2] sm:$0x1]
    %v62 = vlaneseq
    %v63 = vshrl.u32 %v62, 7
    %v64 = vsub.s32 0, %v63
    %v65 = vrot.slane %v60, %v64
    %67 = vmatprep.subr.mxu0 0.0
    %68 = vmatpush1.msra.mxu0 %v44
    %69 = vmatprep.subr.mxu0 0.0
    %70 = vmatpush1.msra.mxu0 %v45
    %71 = vmatprep.subr.mxu0 0.0
    %72 = vmatpush1.msra.mxu0 %v46
    %73 = vmatprep.subr.mxu0 0.0
    %74 = vmatpush1.msra.mxu0 %v47
    %75 = vmatprep.subr.mxu0 0.0
    %76 = vmatpush1.msra.mxu0 %v48
    %77 = vmatprep.subr.mxu0 0.0
    %78 = vmatpush1.msra.mxu0 %v49
    %79 = vmatprep.subr.mxu0 0.0
    %80 = vmatpush1.msra.mxu0 %v50
    %81 = vmatprep.subr.mxu0 0.0
    %82 = vmatpush1.msra.mxu0 %v51
    %83 = vmatprep.subr.mxu0 0.0
    %84 = vmatpush1.msra.mxu0 %v52
    %85 = vmatprep.subr.mxu0 0.0
    %86 = vmatpush1.msra.mxu0 %v53
    %87 = vmatprep.subr.mxu0 0.0
    %88 = vmatpush1.msra.mxu0 %v54
    %89 = vmatprep.subr.mxu0 0.0
    %90 = vmatpush1.msra.mxu0 %v55
    %91 = vmatprep.subr.mxu0 0.0
    %92 = vmatpush1.msra.mxu0 %v56
    %93 = vmatprep.subr.mxu0 0.0
    %94 = vmatpush1.msra.mxu0 %v57
    %95 = vmatprep.subr.mxu0 0.0
    %96 = vmatpush1.msra.mxu0 %v58
    %97 = vmatprep.subr.mxu0 0.0
    %98 = vmatpush1.msra.mxu0 %v59
    %99 = vmatprep.subr.mxu0 0.0
    %100 = vmatpush1.msra.mxu0 0.0
    %101 = vmatprep.subr.mxu0 0.0
    %102 = vmatpush1.msra.mxu0 0.0
    %103 = vmatprep.subr.mxu0 0.0
    %104 = vmatpush1.msra.mxu0 0.0
    %105 = vmatprep.subr.mxu0 0.0
    %106 = vmatpush1.msra.mxu0 0.0
    %107 = vmatprep.subr.mxu0 0.0
    %108 = vmatpush1.msra.mxu0 0.0
    %109 = vmatprep.subr.mxu0 0.0
    %110 = vmatpush1.msra.mxu0 0.0
    %111 = vmatprep.subr.mxu0 0.0
    %112 = vmatpush1.msra.mxu0 0.0
    %113 = vmatprep.subr.mxu0 0.0
    %114 = vmatpush1.msra.mxu0 0.0
    %115 = vmatprep.subr.mxu0 0.0
    %116 = vmatpush1.msra.mxu0 0.0
    %117 = vmatprep.subr.mxu0 0.0
    %118 = vmatpush1.msra.mxu0 0.0
    %119 = vmatprep.subr.mxu0 0.0
    %120 = vmatpush1.msra.mxu0 0.0
    %121 = vmatprep.subr.mxu0 0.0
    %122 = vmatpush1.msra.mxu0 0.0
    %123 = vmatprep.subr.mxu0 0.0
    %124 = vmatpush1.msra.mxu0 0.0
    %125 = vmatprep.subr.mxu0 0.0
    %126 = vmatpush1.msra.mxu0 0.0
    %127 = vmatprep.subr.mxu0 0.0
    %128 = vmatpush1.msra.mxu0 0.0
    %129 = vmatprep.subr.mxu0 0.0
    %130 = vmatpush1.msra.mxu0 0.0
    %131 = vmatprep.mubr.f32.mxu0 0.0
    %132 = vmatmul.mubr.f32.gmra.mrb[0].mxu0 %v43
    %v133 = vpop.f32.mrb[0].mxu0
    %v134 = vadd.f32 %v65, %v133
    %v135 = vpop.f32.mrb[0].mxu0
    %136 = vdwg.mxu0
    %v137 = vmax.f32 %v134, 0.0
    %138 = vst [vmem:[#allocation7] sm:$0xff] %v137
    // Predicated region
    $region22: #{tpu_custom_call.1} parent=1 // pred_check
      _
    $region23: #{tpu_custom_call.1} parent=1 // pred_check_branch
      %140 = sbr.rel (0) target = $region25
    $region24: #{tpu_custom_call.1} parent=1 // pred_region
      %s142 = ssub.s32 128, 16
      %143 = vsyncadd [#allocation4], %s142
      %s144 = sshll.u32 [#allocation7], 4
      %s145 = int_to_ptr.vmem [resolvable:$true] %s144
      %150 = dma.vmem_to_hbm [thread:$0]  %s145, 16, %s3, [#allocation4], 16, 16, 1
    $region25: #{tpu_custom_call.1} parent=1 // pred_fallthru
      _
    // Predicated region
    $region26: #{tpu_custom_call.1} parent=1 // pred_check
      _
    $region27: #{tpu_custom_call.1} parent=1 // pred_check_branch
      %152 = sbr.rel (0) target = $region29
    $region28: #{tpu_custom_call.1} parent=1 // pred_region
      %153 = dma.done [#allocation4], 128
    $region29: #{tpu_custom_call.1} parent=1 // pred_fallthru
      _
    %154 = vsyncpa [#allocation3], 1
    %155 = vsyncpa [#allocation6], 1
    %156 = vsyncpa [#allocation4], 1

</llo_original>
